<compile_context>
chip_gen: v7x
topology: tpu7x:2x2x1
jax: 0.10.0
libtpu: 0.0.40
codegen_flags: <defaults>
</compile_context>

<pallas_src>
import jax
import jax.numpy as jnp
from jax.experimental import pallas as pl
from jax.experimental.pallas import tpu as pltpu

_LANES = 512          # lane-dense last dim (multiple of 128)
_MAX_TILE_ROWS = 1024 # 1024 x 512 f32 = 2 MiB per tile buffer


def _affine_relu_kernel(w_ref, b_ref, x_ref, o_ref):
    # w_ref, b_ref: (1,) scalars in SMEM; x_ref/o_ref: (tile_rows, _LANES) in VMEM.
    w = w_ref[0]
    b = b_ref[0]
    o_ref[...] = jnp.maximum(x_ref[...] * w + b, 0.0)  # 1x1 conv (scalar affine) + ReLU
    # TODO(synk): QuantStub/DeQuantStub are identity in the float (non-converted)
    # model; the converted int8 rounding path is not reproduced here.


def conv1x1_relu(x_nchw: jax.Array, weight: jax.Array, bias: jax.Array) -> jax.Array:
    """x_nchw: (N, 1, H, W); weight: (1,1,1,1); bias: (1,). Returns same shape as x."""
    N, C, H, W = x_nchw.shape
    assert C == 1, "module has Conv2d(1, 1, 1)"
    orig_dtype = x_nchw.dtype
    total = N * C * H * W

    w_scalar = weight.reshape(1).astype(jnp.float32)
    b_scalar = bias.reshape(1).astype(jnp.float32)

    # Lane-dense layout: flatten everything, pad to a whole number of
    # (tile_rows, _LANES) tiles, reshape to 2-D with 512 lanes.
    rows_needed = pl.cdiv(total, _LANES)
    tile_rows = min(_MAX_TILE_ROWS, pl.cdiv(rows_needed, 8) * 8)  # multiple of 8
    rows = pl.cdiv(rows_needed, tile_rows) * tile_rows
    padded = rows * _LANES

    x_flat = x_nchw.reshape(-1).astype(jnp.float32)
    if padded != total:
        x_flat = jnp.pad(x_flat, (0, padded - total))
    x2d = x_flat.reshape(rows, _LANES)

    grid = (rows // tile_rows,)

    out2d = pl.pallas_call(
        _affine_relu_kernel,
        out_shape=jax.ShapeDtypeStruct((rows, _LANES), jnp.float32),
        grid=grid,
        in_specs=[
            pl.BlockSpec(memory_space=pltpu.SMEM),                 # weight scalar
            pl.BlockSpec(memory_space=pltpu.SMEM),                 # bias scalar
            pl.BlockSpec((tile_rows, _LANES), lambda i: (i, 0)),   # input tile
        ],
        out_specs=pl.BlockSpec((tile_rows, _LANES), lambda i: (i, 0)),
        compiler_params=pltpu.CompilerParams(
            dimension_semantics=("parallel",),
        ),
    )(w_scalar, b_scalar, x2d)

    out_flat = out2d.reshape(-1)[:total]
    return out_flat.reshape(N, C, H, W).astype(orig_dtype)


if __name__ == "__main__":
    key = jax.random.PRNGKey(0)
    kx, kw, kb = jax.random.split(key, 3)

    # Small shapes consistent with Conv2d(1, 1, 1): NCHW with C=1.
    x = jax.random.normal(kx, (2, 1, 16, 16), dtype=jnp.float32)

    # Deterministic parameter init (same shapes as nn.Conv2d(1,1,1)).
    weight = jax.random.uniform(kw, (1, 1, 1, 1), minval=-1.0, maxval=1.0, dtype=jnp.float32)
    bias = jax.random.uniform(kb, (1,), minval=-1.0, maxval=1.0, dtype=jnp.float32)

    out = conv1x1_relu(x, weight, bias)
    out = jax.block_until_ready(out)

    # Reference check in plain JAX.
    ref = jnp.maximum(x * weight.reshape(()) + bias.reshape(()), 0.0)
    assert out.shape == (2, 1, 16, 16)
    assert jnp.allclose(out, ref, atol=1e-6), "mismatch vs reference"

    print("KERNEL_OK")
</pallas_src>

<mosaic_0001>
module attributes {stable_mosaic.version = 11 : i64} {
  func.func @_affine_relu_kernel(%arg0: i32, %arg1: memref<1xf32, #tpu.memory_space<smem>>, %arg2: memref<1xf32, #tpu.memory_space<smem>>, %arg3: memref<8x512xf32, #tpu.memory_space<vmem>>, %arg4: memref<8x512xf32, #tpu.memory_space<vmem>>) attributes {dimension_semantics = [#tpu.dimension_semantics<parallel>], iteration_bounds = array<i64: 1>, scalar_prefetch = 0 : i64, scratch_operands = 0 : i64, tpu.core_type = #tpu.core_type<tc>, window_params = [{transform_indices = @transform_0, window_bounds = array<i64: 1>}, {transform_indices = @transform_1, window_bounds = array<i64: 1>}, {transform_indices = @transform_2, window_bounds = array<i64: 8, 512>}, {transform_indices = @transform_3, window_bounds = array<i64: 8, 512>}]} {
    %c0 = arith.constant 0 : index
    %0 = memref.load %arg1[%c0] : memref<1xf32, #tpu.memory_space<smem>>
    %c0_0 = arith.constant 0 : index
    %1 = memref.load %arg2[%c0_0] : memref<1xf32, #tpu.memory_space<smem>>
    %c0_1 = arith.constant 0 : index
    %c0_2 = arith.constant 0 : index
    %2 = vector.load %arg3[%c0_1, %c0_2] : memref<8x512xf32, #tpu.memory_space<vmem>>, vector<8x512xf32>
    %3 = vector.broadcast %0 : f32 to vector<8x512xf32>
    %4 = arith.mulf %2, %3 : vector<8x512xf32>
    %5 = vector.broadcast %1 : f32 to vector<8x512xf32>
    %6 = arith.addf %4, %5 : vector<8x512xf32>
    %cst = arith.constant 0.000000e+00 : f32
    %7 = vector.broadcast %cst : f32 to vector<8x512xf32>
    %8 = arith.maximumf %6, %7 : vector<8x512xf32>
    %c0_3 = arith.constant 0 : index
    %c0_4 = arith.constant 0 : index
    %9 = vector.load %arg4[%c0_3, %c0_4] : memref<8x512xf32, #tpu.memory_space<vmem>>, vector<8x512xf32>
    tpu.vector_store %arg4[%c0_3, %c0_4], %8 {strides = array<i32>} : memref<8x512xf32, #tpu.memory_space<vmem>>, vector<8x512xf32>,
    return
  }
  func.func @transform_0(%arg0: i32) -> i32 {
    %c0_i32 = arith.constant 0 : i32
    %c0_i32_0 = arith.constant 0 : i32
    return %c0_i32 : i32
  }
  func.func @transform_1(%arg0: i32) -> i32 {
    %c0_i32 = arith.constant 0 : i32
    %c0_i32_0 = arith.constant 0 : i32
    return %c0_i32 : i32
  }
  func.func @transform_2(%arg0: i32) -> (i32, i32) {
    %c0_i32 = arith.constant 0 : i32
    %c0_i32_0 = arith.constant 0 : i32
    return %arg0, %c0_i32 : i32, i32
  }
  func.func @transform_3(%arg0: i32) -> (i32, i32) {
    %c0_i32 = arith.constant 0 : i32
    %c0_i32_0 = arith.constant 0 : i32
    return %arg0, %c0_i32 : i32, i32
  }
}

</mosaic_0001>

<llo_original>
// kernel: tpu_custom_call.1
$region0: #{tpu_custom_call.1}
  #allocation0 [shape = 'u32[]', space=smem, size = 0x4, offset = 0x4, fixed_abs, tag = 'smem constant byte address 0x4 - core index']
  #allocation1 [shape = 'u32[144,128]{1,0:T(1,128)}', space=vmem, size = 0x12000, scoped, tag = 'internal scratch']
  #allocation2 [shape = 'f32[1]{0:T(128)S(6)}', space=smem, size = 0x200, scoped, tag = 'scoped memory for tpu_custom_call.1']
  #allocation3 [shape = 'f32[1]{0:T(128)S(6)}', space=smem, size = 0x200, scoped, tag = 'scoped memory for tpu_custom_call.1']
  %s0 = inlined_call_operand.<no memory space> [shape: f32[1], index: 0, kind: input, shape index: {}]
  %s1 = inlined_call_operand.<no memory space> [shape: f32[1], index: 1, kind: input, shape index: {}]
  %s2 = inlined_call_operand.hbm [shape: f32[8,512], index: 2, kind: input, shape index: {}]
  %s3 = inlined_call_operand.hbm [shape: f32[8,512], index: 3, kind: output, shape index: {}]
  %s4 = sld [smem:[#allocation0]]
  $region26: #{tpu_custom_call.1} parent=0
    _
  %s6 = ssub.s32 1, %s4
  %s7 = scalar_select 0, %s6, %s4
  %8 = sst [smem:[#allocation2]] %s0
  %9 = sst [smem:[#allocation3]] %s1
  $region1: #{tpu_custom_call.1} parent=0
    #allocation4 [shape = 'u8[16384]{0}', space=vmem, size = 0x4000, scoped, tag = 'input window, operand 2, single buffered']
    #allocation5 [shape = 's32[1]{0}', space=sflag, size = 0x4, scoped, tag = 'scoped memory for tpu_custom_call.1']
    #allocation6 [shape = 's32[1]{0}', space=sflag, size = 0x4, scoped, tag = 'scoped memory for tpu_custom_call.1']
    #allocation7 [shape = 'u8[16384]{0}', space=vmem, size = 0x4000, scoped, tag = 'output window, operand 0, single buffered']
    %10 = vsyncpa [#allocation5], 0
    %11 = vsyncpa [#allocation6], 0
    // Predicated region
    $region2: #{tpu_custom_call.1} parent=1 // pred_check
      _
    $region3: #{tpu_custom_call.1} parent=1 // pred_check_branch
      %13 = sbr.rel (0) target = $region5
    $region4: #{tpu_custom_call.1} parent=1 // pred_region
      _
    $region5: #{tpu_custom_call.1} parent=1 // pred_fallthru
      _
    // Predicated region
    $region6: #{tpu_custom_call.1} parent=1 // pred_check
      _
    $region7: #{tpu_custom_call.1} parent=1 // pred_check_branch
      %15 = sbr.rel (0) target = $region9
    $region8: #{tpu_custom_call.1} parent=1 // pred_region
      _
    $region9: #{tpu_custom_call.1} parent=1 // pred_fallthru
      _
    // Predicated region
    $region10: #{tpu_custom_call.1} parent=1 // pred_check
      _
    $region11: #{tpu_custom_call.1} parent=1 // pred_check_branch
      %17 = sbr.rel (0) target = $region13
    $region12: #{tpu_custom_call.1} parent=1 // pred_region
      %s19 = ssub.s32 512, 512
      %20 = vsyncadd [#allocation5], %s19
      %s22 = sshll.u32 [#allocation4], 4
      %s23 = int_to_ptr.vmem [resolvable:$true] %s22
      %25 = dma.hbm_to_vmem [thread:$0]  %s2, 512, %s23, [#allocation5]
    $region13: #{tpu_custom_call.1} parent=1 // pred_fallthru
      _
    // Predicated region
    $region14: #{tpu_custom_call.1} parent=1 // pred_check
      _
    $region15: #{tpu_custom_call.1} parent=1 // pred_check_branch
      %27 = sbr.rel (0) target = $region17
    $region16: #{tpu_custom_call.1} parent=1 // pred_region
      %28 = dma.done [#allocation5], 512
    $region17: #{tpu_custom_call.1} parent=1 // pred_fallthru
      _
    %s29 = sld [smem:[#allocation2]]
    %s30 = sld [smem:[#allocation3]]
    %v31 = vld [vmem:[#allocation4] sm:$0xff]
    %v32 = vld [vmem:[#allocation4 + $0x8] sm:$0xff]
    %v33 = vld [vmem:[#allocation4 + $0x10] sm:$0xff]
    %v34 = vld [vmem:[#allocation4 + $0x18] sm:$0xff]
    %v35 = vstv %s29
    %v36 = vmul.f32 %v31, %v35
    %v37 = vmul.f32 %v32, %v35
    %v38 = vmul.f32 %v33, %v35
    %v39 = vmul.f32 %v34, %v35
    %v40 = vstv %s30
    %v41 = vadd.f32 %v36, %v40
    %v42 = vadd.f32 %v37, %v40
    %v43 = vadd.f32 %v38, %v40
    %v44 = vadd.f32 %v39, %v40
    %v45 = vmax.f32 %v41, 0.0
    %v46 = vmax.f32 %v42, 0.0
    %v47 = vmax.f32 %v43, 0.0
    %v48 = vmax.f32 %v44, 0.0
    %49 = vst [vmem:[#allocation7] sm:$0xff] %v45
    %50 = vst [vmem:[#allocation7 + $0x8] sm:$0xff] %v46
    %51 = vst [vmem:[#allocation7 + $0x10] sm:$0xff] %v47
    %52 = vst [vmem:[#allocation7 + $0x18] sm:$0xff] %v48
    // Predicated region
    $region18: #{tpu_custom_call.1} parent=1 // pred_check
      _
    $region19: #{tpu_custom_call.1} parent=1 // pred_check_branch
      %54 = sbr.rel (0) target = $region21
    $region20: #{tpu_custom_call.1} parent=1 // pred_region
      %s56 = ssub.s32 512, 512
      %57 = vsyncadd [#allocation6], %s56
      %s59 = sshll.u32 [#allocation7], 4
      %s60 = int_to_ptr.vmem [resolvable:$true] %s59
      %62 = dma.vmem_to_hbm [thread:$0]  %s60, 512, %s3, [#allocation6]
    $region21: #{tpu_custom_call.1} parent=1 // pred_fallthru
      _
    // Predicated region
    $region22: #{tpu_custom_call.1} parent=1 // pred_check
      _
    $region23: #{tpu_custom_call.1} parent=1 // pred_check_branch
      %64 = sbr.rel (0) target = $region25
    $region24: #{tpu_custom_call.1} parent=1 // pred_region
      %65 = dma.done [#allocation6], 512
    $region25: #{tpu_custom_call.1} parent=1 // pred_fallthru
      _
    %66 = vsyncpa [#allocation5], 1
    %67 = vsyncpa [#allocation6], 1

</llo_original>
